<compile_context>
chip_gen: v6e
topology: v6e:2x2x1
jax: 0.10.0
libtpu: 0.0.40
codegen_flags: <defaults>
</compile_context>

<pallas_src>
import jax
import jax.numpy as jnp
from jax.experimental import pallas as pl
from jax.experimental.pallas import tpu as pltpu


def _lstm_cell_kernel(x_ref, h0_ref, c0_ref, wih_ref, whh_ref, bias_ref,
                      h1_ref, c1_ref):
    """One batch-tile of the LSTM cell.

    x_ref    : (TB, H)   caller dtype (cast to bf16 in-kernel)
    h0_ref   : (TB, H)   caller dtype (cast to bf16 in-kernel)
    c0_ref   : (TB, H)   caller dtype (cast to f32 in-kernel)
    wih_ref  : (H, 4H)   bf16   rows [:H] of the StructuredLinear stand-in
    whh_ref  : (H, 4H)   bf16
    bias_ref : (1, 4H)   f32
    h1_ref   : (TB, H)   bf16 (or f32)
    c1_ref   : (TB, H)   f32
    """
    H = c0_ref.shape[1]

    xb = x_ref[...].astype(jnp.bfloat16)
    hb = h0_ref[...].astype(jnp.bfloat16)

    # Two accumulating MXU matmuls (bf16 operands, f32 accumulation); the
    # [x | h0] concat never exists anywhere.
    gates = jnp.dot(xb, wih_ref[...], preferred_element_type=jnp.float32)
    gates = gates + jnp.dot(hb, whh_ref[...],
                            preferred_element_type=jnp.float32)
    gates = gates + bias_ref[...]

    # Gate ordering matches the word_language_model cell: f, i, o, g.
    f = gates[:, 0 * H:1 * H]
    i = gates[:, 1 * H:2 * H]
    o = gates[:, 2 * H:3 * H]
    g = gates[:, 3 * H:4 * H]

    c0 = c0_ref[...].astype(jnp.float32)
    c1 = jax.nn.sigmoid(f) * c0 + jax.nn.sigmoid(i) * jnp.tanh(g)
    h1 = jax.nn.sigmoid(o) * jnp.tanh(c1)

    c1_ref[...] = c1.astype(c1_ref.dtype)
    h1_ref[...] = h1.astype(h1_ref.dtype)


def prepare_lstm_params(W_ih, W_hh, bias, hidden_size):
    """Per-layer weight prep. Call ONCE and reuse across timesteps.

    Rows H:4H of W_ih only ever multiply the zero padding of input_padded, so
    x_padded @ W_ih == x @ W_ih[:H, :] exactly -> those rows are dropped.
    """
    H = hidden_size
    w_ih = jnp.asarray(W_ih)[:H, :].astype(jnp.bfloat16)       # (H, 4H)
    w_hh = jnp.asarray(W_hh).astype(jnp.bfloat16)               # (H, 4H)
    bias2d = jnp.asarray(bias).reshape(1, 4 * H).astype(jnp.float32)
    return w_ih, w_hh, bias2d


def _pick_batch_tile(B):
    """Divisor of B, multiple of 16 (pref.) or 8, capped per TPU generation."""
    cap = 256
    try:
        kind = jax.devices()[0].device_kind.lower()
        if "v5 lite" in kind or "v5e" in kind or "v5lite" in kind:
            cap = 128     # v5e MXU is 128-wide; bigger TB buys nothing
    except Exception:
        pass
    if B <= cap:
        return B
    m16 = [t for t in range(16, cap + 1, 16) if B % t == 0]
    if m16:
        return max(m16)
    m8 = [t for t in range(8, cap + 1, 8) if B % t == 0]
    if m8:
        return max(m8)
    return B              # fall back: single full-batch tile (always legal)


def _vmem_limit_bytes(TB, H, x_bytes, h0_bytes, c0_bytes, h_out_bytes):
    stream_in = 2 * TB * H * (x_bytes + h0_bytes + c0_bytes)   # double-buffered
    stream_out = 2 * TB * H * (h_out_bytes + 4)
    weights = 2 * (2 * H * 4 * H * 2 + 4 * H * 4)              # bf16 w's + f32 bias
    scratch = 4 * TB * 4 * H * 4                               # gates + temps slack
    need = stream_in + stream_out + weights + scratch + (2 << 20)
    return int(min(max(need, 8 << 20), 64 << 20))


def lstm_cell(x, hx, params, *, batch_tile=None, h_dtype=jnp.bfloat16):
    """Pallas LSTMCell forward. Returns (h_1, c_1): (B,H) h_dtype / f32."""
    w_ih, w_hh, bias2d = params
    h0, c0 = hx
    # Mimic the PyTorch .squeeze() of a leading (1, B, H) dim, but never
    # squeeze the batch dimension (handles B == 1 correctly).
    if h0.ndim == 3:
        h0 = h0.reshape(h0.shape[-2], h0.shape[-1])
        c0 = c0.reshape(c0.shape[-2], c0.shape[-1])
    B, H = h0.shape

    TB = batch_tile if batch_tile is not None else _pick_batch_tile(B)
    if B % TB != 0:
        TB = B
    grid = (B // TB,)

    h_bytes = jnp.dtype(h_dtype).itemsize
    x_bytes = jnp.dtype(x.dtype).itemsize
    h0_bytes = jnp.dtype(h0.dtype).itemsize
    c0_bytes = jnp.dtype(c0.dtype).itemsize

    flops = 2 * B * (2 * H) * (4 * H)
    bytes_accessed = (B * H * (x_bytes + h0_bytes + c0_bytes)      # inputs
                      + w_ih.size * 2 + w_hh.size * 2              # bf16 weights
                      + bias2d.size * 4                            # f32 bias
                      + B * H * (h_bytes + 4))                     # outputs

    h1, c1 = pl.pallas_call(
        _lstm_cell_kernel,
        out_shape=(jax.ShapeDtypeStruct((B, H), h_dtype),
                   jax.ShapeDtypeStruct((B, H), jnp.float32)),
        grid=grid,
        in_specs=[
            pl.BlockSpec((TB, H), lambda b: (b, 0)),          # x
            pl.BlockSpec((TB, H), lambda b: (b, 0)),          # h0
            pl.BlockSpec((TB, H), lambda b: (b, 0)),          # c0
            pl.BlockSpec((H, 4 * H), lambda b: (0, 0)),       # W_ih[:H]
            pl.BlockSpec((H, 4 * H), lambda b: (0, 0)),       # W_hh
            pl.BlockSpec((1, 4 * H), lambda b: (0, 0)),       # bias
        ],
        out_specs=(pl.BlockSpec((TB, H), lambda b: (b, 0)),
                   pl.BlockSpec((TB, H), lambda b: (b, 0))),
        compiler_params=pltpu.CompilerParams(
            # On v7x, CORE_PARALLEL here would split batch tiles across the
            # two TensorCores; kept as plain "parallel" for portability.
            dimension_semantics=("parallel",),
            vmem_limit_bytes=_vmem_limit_bytes(
                TB, H, x_bytes, h0_bytes, c0_bytes, h_bytes)),
        cost_estimate=pl.CostEstimate(
            flops=flops,
            transcendentals=5 * B * H,
            bytes_accessed=bytes_accessed),
    )(x, h0, c0, w_ih, w_hh, bias2d)
    return h1, c1


def lstm_cell_ref(x, hx, W_ih, W_hh, bias):
    """Pure-JAX reference mirroring the PyTorch forward (full W_ih, zero pad)."""
    h0, c0 = hx
    if h0.ndim == 3:
        h0 = h0.reshape(h0.shape[-2], h0.shape[-1])
        c0 = c0.reshape(c0.shape[-2], c0.shape[-1])
    B, H = h0.shape
    wh_b = h0 @ W_hh + bias[None, :]
    x_padded = jnp.concatenate([x, jnp.zeros((B, 3 * H), x.dtype)], axis=1)
    wi = x_padded @ W_ih
    gates = wh_b + wi
    f, i, o, g = jnp.split(gates, 4, axis=1)
    c1 = jax.nn.sigmoid(f) * c0 + jax.nn.sigmoid(i) * jnp.tanh(g)
    h1 = jax.nn.sigmoid(o) * jnp.tanh(c1)
    return h1, c1


if __name__ == "__main__":
    B = 8      # batch
    H = 128    # hidden_size == input_size (multiple of 128 -> lane-dense gates)

    key = jax.random.PRNGKey(0)
    k_x, k_h, k_c, k_w = jax.random.split(key, 4)

    x = jax.random.normal(k_x, (B, H), jnp.float32)
    h0 = jax.random.normal(k_h, (1, B, H), jnp.float32)   # leading 1-dim as in PyTorch
    c0 = jax.random.normal(k_c, (1, B, H), jnp.float32)

    # Parameters (matches reset_parameters where applicable):
    W_hh = jnp.tile(jnp.eye(H, dtype=jnp.float32), (1, 4))            # (H, 4H)
    bias = jnp.zeros((4 * H,), jnp.float32)                           # zeros
    W_ih = 0.1 * jax.random.normal(k_w, (4 * H, 4 * H), jnp.float32)  # StructuredLinear stand-in

    # Weight prep hoisted out of the per-step path (done once per layer).
    params = prepare_lstm_params(W_ih, W_hh, bias, H)

    lstm_cell_jit = jax.jit(lstm_cell)
    h1, c1 = lstm_cell_jit(x, (h0, c0), params)
    jax.block_until_ready((h1, c1))

    h1_ref, c1_ref = lstm_cell_ref(x, (h0, c0), W_ih, W_hh, bias)
    # bf16 matmul operands (f32 accumulation) + bf16 h output -> modest tolerance.
    h1_f32 = h1.astype(jnp.float32)
    assert jnp.allclose(h1_f32, h1_ref, atol=3e-2, rtol=3e-2), \
        float(jnp.max(jnp.abs(h1_f32 - h1_ref)))
    assert jnp.allclose(c1, c1_ref, atol=3e-2, rtol=3e-2), \
        float(jnp.max(jnp.abs(c1 - c1_ref)))

    print("KERNEL_OK")
</pallas_src>

<mosaic_0001>
module attributes {stable_mosaic.version = 11 : i64} {
  func.func @_lstm_cell_kernel(%arg0: i32, %arg1: memref<8x128xf32, #tpu.memory_space<vmem>>, %arg2: memref<8x128xf32, #tpu.memory_space<vmem>>, %arg3: memref<8x128xf32, #tpu.memory_space<vmem>>, %arg4: memref<128x512xbf16, #tpu.memory_space<vmem>>, %arg5: memref<128x512xbf16, #tpu.memory_space<vmem>>, %arg6: memref<1x512xf32, #tpu.memory_space<vmem>>, %arg7: memref<8x128xbf16, #tpu.memory_space<vmem>>, %arg8: memref<8x128xf32, #tpu.memory_space<vmem>>) attributes {dimension_semantics = [#tpu.dimension_semantics<parallel>], iteration_bounds = array<i64: 1>, scalar_prefetch = 0 : i64, scratch_operands = 0 : i64, tpu.core_type = #tpu.core_type<tc>, window_params = [{transform_indices = @transform_0, window_bounds = array<i64: 8, 128>}, {transform_indices = @transform_1, window_bounds = array<i64: 8, 128>}, {transform_indices = @transform_2, window_bounds = array<i64: 8, 128>}, {pipeline_mode = #tpu.pipeline_mode<synchronous>, transform_indices = @transform_3, window_bounds = array<i64: 128, 512>}, {pipeline_mode = #tpu.pipeline_mode<synchronous>, transform_indices = @transform_4, window_bounds = array<i64: 128, 512>}, {pipeline_mode = #tpu.pipeline_mode<synchronous>, transform_indices = @transform_5, window_bounds = array<i64: 1, 512>}, {transform_indices = @transform_6, window_bounds = array<i64: 8, 128>}, {transform_indices = @transform_7, window_bounds = array<i64: 8, 128>}]} {
    %c0 = arith.constant 0 : index
    %c0_0 = arith.constant 0 : index
    %0 = vector.load %arg1[%c0, %c0_0] : memref<8x128xf32, #tpu.memory_space<vmem>>, vector<8x128xf32>
    %1 = arith.truncf %0 : vector<8x128xf32> to vector<8x128xbf16>
    %c0_1 = arith.constant 0 : index
    %c0_2 = arith.constant 0 : index
    %2 = vector.load %arg2[%c0_1, %c0_2] : memref<8x128xf32, #tpu.memory_space<vmem>>, vector<8x128xf32>
    %3 = arith.truncf %2 : vector<8x128xf32> to vector<8x128xbf16>
    %c0_3 = arith.constant 0 : index
    %c0_4 = arith.constant 0 : index
    %4 = vector.load %arg4[%c0_3, %c0_4] : memref<128x512xbf16, #tpu.memory_space<vmem>>, vector<128x512xbf16>
    %cst = arith.constant dense<0.000000e+00> : vector<8x512xf32>
    %5 = tpu.matmul %1, %4, %cst {dimension_numbers = #tpu.dot_dimension_numbers<[1], [0], [0], [1], [0, 0, 1, 1], [], []>} : vector<8x128xbf16>, vector<128x512xbf16>, vector<8x512xf32> -> vector<8x512xf32>
    %c0_5 = arith.constant 0 : index
    %c0_6 = arith.constant 0 : index
    %6 = vector.load %arg5[%c0_5, %c0_6] : memref<128x512xbf16, #tpu.memory_space<vmem>>, vector<128x512xbf16>
    %cst_7 = arith.constant dense<0.000000e+00> : vector<8x512xf32>
    %7 = tpu.matmul %3, %6, %cst_7 {dimension_numbers = #tpu.dot_dimension_numbers<[1], [0], [0], [1], [0, 0, 1, 1], [], []>} : vector<8x128xbf16>, vector<128x512xbf16>, vector<8x512xf32> -> vector<8x512xf32>
    %8 = arith.addf %5, %7 : vector<8x512xf32>
    %c0_8 = arith.constant 0 : index
    %c0_9 = arith.constant 0 : index
    %9 = vector.load %arg6[%c0_8, %c0_9] : memref<1x512xf32, #tpu.memory_space<vmem>>, vector<1x512xf32>
    %10 = vector.broadcast %9 : vector<1x512xf32> to vector<8x512xf32>
    %11 = arith.addf %8, %10 : vector<8x512xf32>
    %12 = vector.extract_strided_slice %11 {offsets = [0, 0], sizes = [8, 128], strides = [1, 1]} : vector<8x512xf32> to vector<8x128xf32>
    %13 = vector.extract_strided_slice %11 {offsets = [0, 128], sizes = [8, 128], strides = [1, 1]} : vector<8x512xf32> to vector<8x128xf32>
    %14 = vector.extract_strided_slice %11 {offsets = [0, 256], sizes = [8, 128], strides = [1, 1]} : vector<8x512xf32> to vector<8x128xf32>
    %15 = vector.extract_strided_slice %11 {offsets = [0, 384], sizes = [8, 128], strides = [1, 1]} : vector<8x512xf32> to vector<8x128xf32>
    %c0_10 = arith.constant 0 : index
    %c0_11 = arith.constant 0 : index
    %16 = vector.load %arg3[%c0_10, %c0_11] : memref<8x128xf32, #tpu.memory_space<vmem>>, vector<8x128xf32>
    %17 = arith.negf %12 : vector<8x128xf32>
    %18 = math.exp %17 : vector<8x128xf32>
    %cst_12 = arith.constant 1.000000e+00 : f32
    %19 = vector.broadcast %cst_12 : f32 to vector<8x128xf32>
    %20 = arith.addf %19, %18 : vector<8x128xf32>
    %21 = arith.divf %19, %20 : vector<8x128xf32>
    %22 = arith.mulf %21, %16 : vector<8x128xf32>
    %23 = arith.negf %13 : vector<8x128xf32>
    %24 = math.exp %23 : vector<8x128xf32>
    %cst_13 = arith.constant 1.000000e+00 : f32
    %25 = vector.broadcast %cst_13 : f32 to vector<8x128xf32>
    %26 = arith.addf %25, %24 : vector<8x128xf32>
    %27 = arith.divf %25, %26 : vector<8x128xf32>
    %28 = math.tanh %15 : vector<8x128xf32>
    %29 = arith.mulf %27, %28 : vector<8x128xf32>
    %30 = arith.addf %22, %29 : vector<8x128xf32>
    %31 = arith.negf %14 : vector<8x128xf32>
    %32 = math.exp %31 : vector<8x128xf32>
    %cst_14 = arith.constant 1.000000e+00 : f32
    %33 = vector.broadcast %cst_14 : f32 to vector<8x128xf32>
    %34 = arith.addf %33, %32 : vector<8x128xf32>
    %35 = arith.divf %33, %34 : vector<8x128xf32>
    %36 = math.tanh %30 : vector<8x128xf32>
    %37 = arith.mulf %35, %36 : vector<8x128xf32>
    %c0_15 = arith.constant 0 : index
    %c0_16 = arith.constant 0 : index
    %38 = vector.load %arg8[%c0_15, %c0_16] : memref<8x128xf32, #tpu.memory_space<vmem>>, vector<8x128xf32>
    tpu.vector_store %arg8[%c0_15, %c0_16], %30 {strides = array<i32>} : memref<8x128xf32, #tpu.memory_space<vmem>>, vector<8x128xf32>,
    %39 = arith.truncf %37 : vector<8x128xf32> to vector<8x128xbf16>
    %c0_17 = arith.constant 0 : index
    %c0_18 = arith.constant 0 : index
    %40 = vector.load %arg7[%c0_17, %c0_18] : memref<8x128xbf16, #tpu.memory_space<vmem>>, vector<8x128xbf16>
    tpu.vector_store %arg7[%c0_17, %c0_18], %39 {strides = array<i32>} : memref<8x128xbf16, #tpu.memory_space<vmem>>, vector<8x128xbf16>,
    return
  }
  func.func @transform_0(%arg0: i32) -> (i32, i32) {
    %c0_i32 = arith.constant 0 : i32
    %c0_i32_0 = arith.constant 0 : i32
    return %arg0, %c0_i32 : i32, i32
  }
  func.func @transform_1(%arg0: i32) -> (i32, i32) {
    %c0_i32 = arith.constant 0 : i32
    %c0_i32_0 = arith.constant 0 : i32
    return %arg0, %c0_i32 : i32, i32
  }
  func.func @transform_2(%arg0: i32) -> (i32, i32) {
    %c0_i32 = arith.constant 0 : i32
    %c0_i32_0 = arith.constant 0 : i32
    return %arg0, %c0_i32 : i32, i32
  }
  func.func @transform_3(%arg0: i32) -> (i32, i32) {
    %c0_i32 = arith.constant 0 : i32
    %c0_i32_0 = arith.constant 0 : i32
    %c0_i32_1 = arith.constant 0 : i32
    return %c0_i32, %c0_i32_0 : i32, i32
  }
  func.func @transform_4(%arg0: i32) -> (i32, i32) {
    %c0_i32 = arith.constant 0 : i32
    %c0_i32_0 = arith.constant 0 : i32
    %c0_i32_1 = arith.constant 0 : i32
    return %c0_i32, %c0_i32_0 : i32, i32
  }
  func.func @transform_5(%arg0: i32) -> (i32, i32) {
    %c0_i32 = arith.constant 0 : i32
    %c0_i32_0 = arith.constant 0 : i32
    %c0_i32_1 = arith.constant 0 : i32
    return %c0_i32, %c0_i32_0 : i32, i32
  }
  func.func @transform_6(%arg0: i32) -> (i32, i32) {
    %c0_i32 = arith.constant 0 : i32
    %c0_i32_0 = arith.constant 0 : i32
    return %arg0, %c0_i32 : i32, i32
  }
  func.func @transform_7(%arg0: i32) -> (i32, i32) {
    %c0_i32 = arith.constant 0 : i32
    %c0_i32_0 = arith.constant 0 : i32
    return %arg0, %c0_i32 : i32, i32
  }
}

</mosaic_0001>

<llo_original>
// kernel: lstm_cell.1
$region0: #{lstm_cell.1}
  #allocation0 [shape = 'u32[]', space=smem, size = 0x4, offset = 0x4, fixed_abs, tag = 'smem constant byte address 0x4 - core index']
  #allocation1 [shape = 'u32[144,128]{1,0:T(1,128)}', space=vmem, size = 0x12000, scoped, tag = 'internal scratch']
  %s0 = inlined_call_operand.hbm [shape: f32[8,128], index: 0, kind: input, shape index: {}]
  %s1 = inlined_call_operand.hbm [shape: f32[8,128], index: 1, kind: input, shape index: {}]
  %s2 = inlined_call_operand.hbm [shape: f32[8,128], index: 2, kind: input, shape index: {}]
  %s3 = inlined_call_operand.hbm [shape: bf16[128,512], index: 3, kind: input, shape index: {}]
  %s4 = inlined_call_operand.hbm [shape: bf16[128,512], index: 4, kind: input, shape index: {}]
  %s5 = inlined_call_operand.vmem [shape: f32[1,512], index: 5, kind: input, shape index: {}]
  %s6 = inlined_call_operand.hbm [shape: bf16[8,128], index: 6, kind: output, shape index: {0}]
  %s7 = inlined_call_operand.hbm [shape: f32[8,128], index: 7, kind: output, shape index: {1}]
  %8 = xla_tuple %s6, %s7
  %s9 = sld [smem:[#allocation0]]
  $region62: #{lstm_cell.1} parent=0
    _
  %s11 = ssub.s32 1, %s9
  %s12 = scalar_select 0, %s11, %s9
  $region1: #{lstm_cell.1} parent=0
    #allocation2 [shape = 'u8[4096]{0}', space=vmem, size = 0x1000, scoped, tag = 'input window, operand 0, single buffered']
    #allocation3 [shape = 's32[1]{0}', space=sflag, size = 0x4, scoped, tag = 'scoped memory for lstm_cell.1']
    #allocation4 [shape = 's32[1]{0}', space=sflag, size = 0x4, scoped, tag = 'scoped memory for lstm_cell.1']
    #allocation5 [shape = 'u8[4096]{0}', space=vmem, size = 0x1000, scoped, tag = 'input window, operand 1, single buffered']
    #allocation6 [shape = 's32[1]{0}', space=sflag, size = 0x4, scoped, tag = 'scoped memory for lstm_cell.1']
    #allocation7 [shape = 'u8[4096]{0}', space=vmem, size = 0x1000, scoped, tag = 'input window, operand 2, single buffered']
    #allocation8 [shape = 'u8[131072]{0}', space=vmem, size = 0x20000, scoped, tag = 'input window, operand 3, single buffered']
    #allocation9 [shape = 's32[1]{0}', space=sflag, size = 0x4, scoped, tag = 'scoped memory for lstm_cell.1']
    #allocation10 [shape = 'u8[131072]{0}', space=vmem, size = 0x20000, scoped, tag = 'input window, operand 4, single buffered']
    #allocation11 [shape = 'u8[2048]{0}', space=vmem, size = 0x800, scoped, tag = 'output window, operand 0, single buffered']
    #allocation12 [shape = 'u8[4096]{0}', space=vmem, size = 0x1000, scoped, tag = 'output window, operand 1, single buffered']
    #allocation13 [shape = 's32[1]{0}', space=sflag, size = 0x4, scoped, tag = 'scoped memory for lstm_cell.1']
    %13 = vsyncpa [#allocation3], 0
    %14 = vsyncpa [#allocation6], 0
    %15 = vsyncpa [#allocation9], 0
    %16 = vsyncpa [#allocation4], 0
    %17 = vsyncpa [#allocation13], 0
    // Predicated region
    $region2: #{lstm_cell.1} parent=1 // pred_check
      _
    $region3: #{lstm_cell.1} parent=1 // pred_check_branch
      %19 = sbr.rel (0) target = $region5
    $region4: #{lstm_cell.1} parent=1 // pred_region
      %s21 = ssub.s32 128, 128
      %22 = vsyncadd [#allocation3], %s21
      %s24 = sshll.u32 [#allocation2], 4
      %s25 = int_to_ptr.vmem [resolvable:$true] %s24
      %27 = dma.hbm_to_vmem [thread:$0]  %s0, 128, %s25, [#allocation3]
    $region5: #{lstm_cell.1} parent=1 // pred_fallthru
      _
    // Predicated region
    $region6: #{lstm_cell.1} parent=1 // pred_check
      _
    $region7: #{lstm_cell.1} parent=1 // pred_check_branch
      %29 = sbr.rel (0) target = $region9
    $region8: #{lstm_cell.1} parent=1 // pred_region
      %s31 = ssub.s32 128, 128
      %32 = vsyncadd [#allocation6], %s31
      %s34 = sshll.u32 [#allocation5], 4
      %s35 = int_to_ptr.vmem [resolvable:$true] %s34
      %37 = dma.hbm_to_vmem [thread:$0]  %s1, 128, %s35, [#allocation6]
    $region9: #{lstm_cell.1} parent=1 // pred_fallthru
      _
    // Predicated region
    $region10: #{lstm_cell.1} parent=1 // pred_check
      _
    $region11: #{lstm_cell.1} parent=1 // pred_check_branch
      %39 = sbr.rel (0) target = $region13
    $region12: #{lstm_cell.1} parent=1 // pred_region
      %s41 = ssub.s32 128, 128
      %42 = vsyncadd [#allocation6], %s41
      %s44 = sshll.u32 [#allocation7], 4
      %s45 = int_to_ptr.vmem [resolvable:$true] %s44
      %47 = dma.hbm_to_vmem [thread:$0]  %s2, 128, %s45, [#allocation6]
    $region13: #{lstm_cell.1} parent=1 // pred_fallthru
      _
    // Predicated region
    $region14: #{lstm_cell.1} parent=1 // pred_check
      _
    $region15: #{lstm_cell.1} parent=1 // pred_check_branch
      %49 = sbr.rel (0) target = $region17
    $region16: #{lstm_cell.1} parent=1 // pred_region
      %s51 = ssub.s32 4096, 4096
      %52 = vsyncadd [#allocation9], %s51
      %s53 = sshll.u32 [#allocation8], 4
      %s54 = int_to_ptr.vmem [resolvable:$true] %s53
      %59 = dma.hbm_to_vmem [thread:$0]  %s3, 4096, %s54, [#allocation9], 256, 256, 16
    $region17: #{lstm_cell.1} parent=1 // pred_fallthru
      _
    // Predicated region
    $region18: #{lstm_cell.1} parent=1 // pred_check
      _
    $region19: #{lstm_cell.1} parent=1 // pred_check_branch
      %61 = sbr.rel (0) target = $region21
    $region20: #{lstm_cell.1} parent=1 // pred_region
      %s63 = ssub.s32 4096, 4096
      %64 = vsyncadd [#allocation9], %s63
      %s65 = sshll.u32 [#allocation10], 4
      %s66 = int_to_ptr.vmem [resolvable:$true] %s65
      %71 = dma.hbm_to_vmem [thread:$0]  %s4, 4096, %s66, [#allocation9], 256, 256, 16
    $region21: #{lstm_cell.1} parent=1 // pred_fallthru
      _
    // Predicated region
    $region22: #{lstm_cell.1} parent=1 // pred_check
      _
    $region23: #{lstm_cell.1} parent=1 // pred_check_branch
      %73 = sbr.rel (0) target = $region25
    $region24: #{lstm_cell.1} parent=1 // pred_region
      _
    $region25: #{lstm_cell.1} parent=1 // pred_fallthru
      _
    // Predicated region
    $region26: #{lstm_cell.1} parent=1 // pred_check
      _
    $region27: #{lstm_cell.1} parent=1 // pred_check_branch
      %75 = sbr.rel (0) target = $region29
    $region28: #{lstm_cell.1} parent=1 // pred_region
      %76 = dma.done [#allocation3], 128
    $region29: #{lstm_cell.1} parent=1 // pred_fallthru
      _
    // Predicated region
    $region30: #{lstm_cell.1} parent=1 // pred_check
      _
    $region31: #{lstm_cell.1} parent=1 // pred_check_branch
      %78 = sbr.rel (0) target = $region33
    $region32: #{lstm_cell.1} parent=1 // pred_region
      %79 = dma.done [#allocation6], 128
    $region33: #{lstm_cell.1} parent=1 // pred_fallthru
      _
    // Predicated region
    $region34: #{lstm_cell.1} parent=1 // pred_check
      _
    $region35: #{lstm_cell.1} parent=1 // pred_check_branch
      %81 = sbr.rel (0) target = $region37
    $region36: #{lstm_cell.1} parent=1 // pred_region
      %82 = dma.done [#allocation6], 128
    $region37: #{lstm_cell.1} parent=1 // pred_fallthru
      _
    // Predicated region
    $region38: #{lstm_cell.1} parent=1 // pred_check
      _
    $region39: #{lstm_cell.1} parent=1 // pred_check_branch
      %84 = sbr.rel (0) target = $region41
    $region40: #{lstm_cell.1} parent=1 // pred_region
      %85 = dma.done [#allocation9], 4096
    $region41: #{lstm_cell.1} parent=1 // pred_fallthru
      _
    // Predicated region
    $region42: #{lstm_cell.1} parent=1 // pred_check
      _
    $region43: #{lstm_cell.1} parent=1 // pred_check_branch
      %87 = sbr.rel (0) target = $region45
    $region44: #{lstm_cell.1} parent=1 // pred_region
      %88 = dma.done [#allocation9], 4096
    $region45: #{lstm_cell.1} parent=1 // pred_fallthru
      _
    %v90 = vld [vmem:[#allocation2] sm:$0xff]
    %v91 = vpack.c.bf16 %v90, %v90
    %v92 = vld [vmem:[#allocation5] sm:$0xff]
    %v93 = vpack.c.bf16 %v92, %v92
    %v94 = vld [vmem:[#allocation8] sm:$0xff]
    %v95 = vld [vmem:[#allocation8 + $0x8] sm:$0xff]
    %v96 = vld [vmem:[#allocation8 + $0x10] sm:$0xff]
    %v97 = vld [vmem:[#allocation8 + $0x18] sm:$0xff]
    %v98 = vld [vmem:[#allocation8 + $0x20] sm:$0xff]
    %v99 = vld [vmem:[#allocation8 + $0x28] sm:$0xff]
    %v100 = vld [vmem:[#allocation8 + $0x30] sm:$0xff]
    %v101 = vld [vmem:[#allocation8 + $0x38] sm:$0xff]
    %v102 = vld [vmem:[#allocation8 + $0x40] sm:$0xff]
    %v103 = vld [vmem:[#allocation8 + $0x48] sm:$0xff]
    %v104 = vld [vmem:[#allocation8 + $0x50] sm:$0xff]
    %v105 = vld [vmem:[#allocation8 + $0x58] sm:$0xff]
    %v106 = vld [vmem:[#allocation8 + $0x60] sm:$0xff]
    %v107 = vld [vmem:[#allocation8 + $0x68] sm:$0xff]
    %v108 = vld [vmem:[#allocation8 + $0x70] sm:$0xff]
    %v109 = vld [vmem:[#allocation8 + $0x78] sm:$0xff]
    %v110 = vld [vmem:[#allocation8 + $0x80] sm:$0xff]
    %v111 = vld [vmem:[#allocation8 + $0x88] sm:$0xff]
    %v112 = vld [vmem:[#allocation8 + $0x90] sm:$0xff]
    %v113 = vld [vmem:[#allocation8 + $0x98] sm:$0xff]
    %v114 = vld [vmem:[#allocation8 + $0xa0] sm:$0xff]
    %v115 = vld [vmem:[#allocation8 + $0xa8] sm:$0xff]
    %v116 = vld [vmem:[#allocation8 + $0xb0] sm:$0xff]
    %v117 = vld [vmem:[#allocation8 + $0xb8] sm:$0xff]
    %v118 = vld [vmem:[#allocation8 + $0xc0] sm:$0xff]
    %v119 = vld [vmem:[#allocation8 + $0xc8] sm:$0xff]
    %v120 = vld [vmem:[#allocation8 + $0xd0] sm:$0xff]
    %v121 = vld [vmem:[#allocation8 + $0xd8] sm:$0xff]
    %v122 = vld [vmem:[#allocation8 + $0xe0] sm:$0xff]
    %v123 = vld [vmem:[#allocation8 + $0xe8] sm:$0xff]
    %v124 = vld [vmem:[#allocation8 + $0xf0] sm:$0xff]
    %v125 = vld [vmem:[#allocation8 + $0xf8] sm:$0xff]
    %v126 = vld [vmem:[#allocation10] sm:$0xff]
    %v127 = vld [vmem:[#allocation10 + $0x8] sm:$0xff]
    %v128 = vld [vmem:[#allocation10 + $0x10] sm:$0xff]
    %v129 = vld [vmem:[#allocation10 + $0x18] sm:$0xff]
    %v130 = vld [vmem:[#allocation10 + $0x20] sm:$0xff]
    %v131 = vld [vmem:[#allocation10 + $0x28] sm:$0xff]
    %v132 = vld [vmem:[#allocation10 + $0x30] sm:$0xff]
    %v133 = vld [vmem:[#allocation10 + $0x38] sm:$0xff]
    %v134 = vld [vmem:[#allocation10 + $0x40] sm:$0xff]
    %v135 = vld [vmem:[#allocation10 + $0x48] sm:$0xff]
    %v136 = vld [vmem:[#allocation10 + $0x50] sm:$0xff]
    %v137 = vld [vmem:[#allocation10 + $0x58] sm:$0xff]
    %v138 = vld [vmem:[#allocation10 + $0x60] sm:$0xff]
    %v139 = vld [vmem:[#allocation10 + $0x68] sm:$0xff]
    %v140 = vld [vmem:[#allocation10 + $0x70] sm:$0xff]
    %v141 = vld [vmem:[#allocation10 + $0x78] sm:$0xff]
    %v142 = vld [vmem:[#allocation10 + $0x80] sm:$0xff]
    %v143 = vld [vmem:[#allocation10 + $0x88] sm:$0xff]
    %v144 = vld [vmem:[#allocation10 + $0x90] sm:$0xff]
    %v145 = vld [vmem:[#allocation10 + $0x98] sm:$0xff]
    %v146 = vld [vmem:[#allocation10 + $0xa0] sm:$0xff]
    %v147 = vld [vmem:[#allocation10 + $0xa8] sm:$0xff]
    %v148 = vld [vmem:[#allocation10 + $0xb0] sm:$0xff]
    %v149 = vld [vmem:[#allocation10 + $0xb8] sm:$0xff]
    %v150 = vld [vmem:[#allocation10 + $0xc0] sm:$0xff]
    %v151 = vld [vmem:[#allocation10 + $0xc8] sm:$0xff]
    %v152 = vld [vmem:[#allocation10 + $0xd0] sm:$0xff]
    %v153 = vld [vmem:[#allocation10 + $0xd8] sm:$0xff]
    %v154 = vld [vmem:[#allocation10 + $0xe0] sm:$0xff]
    %v155 = vld [vmem:[#allocation10 + $0xe8] sm:$0xff]
    %v156 = vld [vmem:[#allocation10 + $0xf0] sm:$0xff]
    %v157 = vld [vmem:[#allocation10 + $0xf8] sm:$0xff]
    %v190 = vunpack.c.l.b16 %v126
    %v191 = vunpack.c.h.b16 %v126
    %v192 = vunpack.c.l.b16 %v127
    %v193 = vunpack.c.h.b16 %v127
    %v194 = vunpack.c.l.b16 %v128
    %v195 = vunpack.c.h.b16 %v128
    %v196 = vunpack.c.l.b16 %v129
    %v197 = vunpack.c.h.b16 %v129
    %v198 = vunpack.c.l.b16 %v130
    %v199 = vunpack.c.h.b16 %v130
    %v200 = vunpack.c.l.b16 %v131
    %v201 = vunpack.c.h.b16 %v131
    %v202 = vunpack.c.l.b16 %v132
    %v203 = vunpack.c.h.b16 %v132
    %v204 = vunpack.c.l.b16 %v133
    %v205 = vunpack.c.h.b16 %v133
    %v206 = vunpack.c.l.b16 %v134
    %v207 = vunpack.c.h.b16 %v134
    %v208 = vunpack.c.l.b16 %v135
    %v209 = vunpack.c.h.b16 %v135
    %v210 = vunpack.c.l.b16 %v136
    %v211 = vunpack.c.h.b16 %v136
    %v212 = vunpack.c.l.b16 %v137
    %v213 = vunpack.c.h.b16 %v137
    %v214 = vunpack.c.l.b16 %v138
    %v215 = vunpack.c.h.b16 %v138
    %v216 = vunpack.c.l.b16 %v139
    %v217 = vunpack.c.h.b16 %v139
    %v218 = vunpack.c.l.b16 %v140
    %v219 = vunpack.c.h.b16 %v140
    %v220 = vunpack.c.l.b16 %v141
    %v221 = vunpack.c.h.b16 %v141
    %v222 = vunpack.c.l.b16 %v142
    %v223 = vunpack.c.h.b16 %v142
    %v224 = vunpack.c.l.b16 %v143
    %v225 = vunpack.c.h.b16 %v143
    %v226 = vunpack.c.l.b16 %v144
    %v227 = vunpack.c.h.b16 %v144
    %v228 = vunpack.c.l.b16 %v145
    %v229 = vunpack.c.h.b16 %v145
    %v230 = vunpack.c.l.b16 %v146
    %v231 = vunpack.c.h.b16 %v146
    %v232 = vunpack.c.l.b16 %v147
    %v233 = vunpack.c.h.b16 %v147
    %v234 = vunpack.c.l.b16 %v148
    %v235 = vunpack.c.h.b16 %v148
    %v236 = vunpack.c.l.b16 %v149
    %v237 = vunpack.c.h.b16 %v149
    %v238 = vunpack.c.l.b16 %v150
    %v239 = vunpack.c.h.b16 %v150
    %v240 = vunpack.c.l.b16 %v151
    %v241 = vunpack.c.h.b16 %v151
    %v242 = vunpack.c.l.b16 %v152
    %v243 = vunpack.c.h.b16 %v152
    %v244 = vunpack.c.l.b16 %v153
    %v245 = vunpack.c.h.b16 %v153
    %v246 = vunpack.c.l.b16 %v154
    %v247 = vunpack.c.h.b16 %v154
    %v248 = vunpack.c.l.b16 %v155
    %v249 = vunpack.c.h.b16 %v155
    %v250 = vunpack.c.l.b16 %v156
    %v251 = vunpack.c.h.b16 %v156
    %v252 = vunpack.c.l.b16 %v157
    %v253 = vunpack.c.h.b16 %v157
    %v254 = vpack.c.b16 %v194, %v190
    %v255 = vpack.c.b16 %v195, %v191
    %v256 = vpack.c.b16 %v196, %v192
    %v257 = vpack.c.b16 %v197, %v193
    %v258 = vpack.c.b16 %v202, %v198
    %v259 = vpack.c.b16 %v203, %v199
    %v260 = vpack.c.b16 %v204, %v200
    %v261 = vpack.c.b16 %v205, %v201
    %v262 = vpack.c.b16 %v210, %v206
    %v263 = vpack.c.b16 %v211, %v207
    %v264 = vpack.c.b16 %v212, %v208
    %v265 = vpack.c.b16 %v213, %v209
    %v266 = vpack.c.b16 %v218, %v214
    %v267 = vpack.c.b16 %v219, %v215
    %v268 = vpack.c.b16 %v220, %v216
    %v269 = vpack.c.b16 %v221, %v217
    %v270 = vpack.c.b16 %v226, %v222
    %v271 = vpack.c.b16 %v227, %v223
    %v272 = vpack.c.b16 %v228, %v224
    %v273 = vpack.c.b16 %v229, %v225
    %v274 = vpack.c.b16 %v234, %v230
    %v275 = vpack.c.b16 %v235, %v231
    %v276 = vpack.c.b16 %v236, %v232
    %v277 = vpack.c.b16 %v237, %v233
    %v278 = vpack.c.b16 %v242, %v238
    %v279 = vpack.c.b16 %v243, %v239
    %v280 = vpack.c.b16 %v244, %v240
    %v281 = vpack.c.b16 %v245, %v241
    %v282 = vpack.c.b16 %v250, %v246
    %v283 = vpack.c.b16 %v251, %v247
    %v284 = vpack.c.b16 %v252, %v248
    %v285 = vpack.c.b16 %v253, %v249
    %318 = vmatprep.subr.bf16.mxu0 %v283
    %319 = vmatpush1.bf16.msra.mxu0 %v282
    %320 = vmatprep.subr.bf16.mxu0 %v279
    %321 = vmatpush1.bf16.msra.mxu0 %v278
    %322 = vmatprep.subr.bf16.mxu0 %v275
    %323 = vmatpush1.bf16.msra.mxu0 %v274
    %324 = vmatprep.subr.bf16.mxu0 %v271
    %325 = vmatpush1.bf16.msra.mxu0 %v270
    %326 = vmatprep.subr.bf16.mxu0 %v267
    %327 = vmatpush1.bf16.msra.mxu0 %v266
    %328 = vmatprep.subr.bf16.mxu0 %v263
    %329 = vmatpush1.bf16.msra.mxu0 %v262
    %330 = vmatprep.subr.bf16.mxu0 %v259
    %331 = vmatpush1.bf16.msra.mxu0 %v258
    %332 = vmatprep.subr.bf16.mxu0 %v255
    %333 = vmatpush1.bf16.msra.mxu0 %v254
    %334 = vmatprep.subr.bf16.mxu0 0
    %335 = vmatpush2.bf16.msra.mxu0 0
    %336 = vmatprep.subr.bf16.mxu0 0
    %337 = vmatpush2.bf16.msra.mxu0 0
    %338 = vmatprep.subr.bf16.mxu0 0
    %339 = vmatpush2.bf16.msra.mxu0 0
    %340 = vmatprep.subr.bf16.mxu0 0
    %341 = vmatpush2.bf16.msra.mxu0 0
    %342 = vmatprep.subr.bf16.mxu0 0
    %343 = vmatpush2.bf16.msra.mxu0 0
    %344 = vmatprep.subr.bf16.mxu0 0
    %345 = vmatpush2.bf16.msra.mxu0 0
    %346 = vmatprep.subr.bf16.mxu0 0
    %347 = vmatpush2.bf16.msra.mxu0 0
    %348 = vmatprep.subr.bf16.mxu0 0
    %349 = vmatpush2.bf16.msra.mxu0 0
    %350 = vmatprep.mubr.bf16.mxu0 0
    %351 = vmatmul.mubr.bf16.gmra.mxu0 %v93
    %v352 = vpop.f32.mrf.mxu0
    %v353 = vadd.f32 0.0, %v352
    %v354 = vpop.f32.mrf.mxu0
    %v355 = vadd.f32 0.0, %v354
    %v356 = vpop.f32.mrf.mxu0
    %v357 = vpop.f32.mrf.mxu0
    %358 = vdwg.mxu0
    %359 = vmatprep.subr.bf16.mxu0 %v285
    %360 = vmatpush1.bf16.msra.mxu0 %v284
    %361 = vmatprep.subr.bf16.mxu0 %v281
    %362 = vmatpush1.bf16.msra.mxu0 %v280
    %363 = vmatprep.subr.bf16.mxu0 %v277
    %364 = vmatpush1.bf16.msra.mxu0 %v276
    %365 = vmatprep.subr.bf16.mxu0 %v273
    %366 = vmatpush1.bf16.msra.mxu0 %v272
    %367 = vmatprep.subr.bf16.mxu0 %v269
    %368 = vmatpush1.bf16.msra.mxu0 %v268
    %369 = vmatprep.subr.bf16.mxu0 %v265
    %370 = vmatpush1.bf16.msra.mxu0 %v264
    %371 = vmatprep.subr.bf16.mxu0 %v261
    %372 = vmatpush1.bf16.msra.mxu0 %v260
    %373 = vmatprep.subr.bf16.mxu0 %v257
    %374 = vmatpush1.bf16.msra.mxu0 %v256
    %375 = vmatprep.subr.bf16.mxu0 0
    %376 = vmatpush2.bf16.msra.mxu0 0
    %377 = vmatprep.subr.bf16.mxu0 0
    %378 = vmatpush2.bf16.msra.mxu0 0
    %379 = vmatprep.subr.bf16.mxu0 0
    %380 = vmatpush2.bf16.msra.mxu0 0
    %381 = vmatprep.subr.bf16.mxu0 0
    %382 = vmatpush2.bf16.msra.mxu0 0
    %383 = vmatprep.subr.bf16.mxu0 0
    %384 = vmatpush2.bf16.msra.mxu0 0
    %385 = vmatprep.subr.bf16.mxu0 0
    %386 = vmatpush2.bf16.msra.mxu0 0
    %387 = vmatprep.subr.bf16.mxu0 0
    %388 = vmatpush2.bf16.msra.mxu0 0
    %389 = vmatprep.subr.bf16.mxu0 0
    %390 = vmatpush2.bf16.msra.mxu0 0
    %391 = vmatprep.mubr.bf16.mxu0 0
    %392 = vmatmul.mubr.bf16.gmra.mxu0 %v93
    %v393 = vpop.f32.mrf.mxu0
    %v394 = vadd.f32 0.0, %v393
    %v395 = vpop.f32.mrf.mxu0
    %v396 = vadd.f32 0.0, %v395
    %v397 = vpop.f32.mrf.mxu0
    %v398 = vpop.f32.mrf.mxu0
    %399 = vdwg.mxu0
    %v432 = vunpack.c.l.b16 %v94
    %v433 = vunpack.c.h.b16 %v94
    %v434 = vunpack.c.l.b16 %v95
    %v435 = vunpack.c.h.b16 %v95
    %v436 = vunpack.c.l.b16 %v96
    %v437 = vunpack.c.h.b16 %v96
    %v438 = vunpack.c.l.b16 %v97
    %v439 = vunpack.c.h.b16 %v97
    %v440 = vunpack.c.l.b16 %v98
    %v441 = vunpack.c.h.b16 %v98
    %v442 = vunpack.c.l.b16 %v99
    %v443 = vunpack.c.h.b16 %v99
    %v444 = vunpack.c.l.b16 %v100
    %v445 = vunpack.c.h.b16 %v100
    %v446 = vunpack.c.l.b16 %v101
    %v447 = vunpack.c.h.b16 %v101
    %v448 = vunpack.c.l.b16 %v102
    %v449 = vunpack.c.h.b16 %v102
    %v450 = vunpack.c.l.b16 %v103
    %v451 = vunpack.c.h.b16 %v103
    %v452 = vunpack.c.l.b16 %v104
    %v453 = vunpack.c.h.b16 %v104
    %v454 = vunpack.c.l.b16 %v105
    %v455 = vunpack.c.h.b16 %v105
    %v456 = vunpack.c.l.b16 %v106
    %v457 = vunpack.c.h.b16 %v106
    %v458 = vunpack.c.l.b16 %v107
    %v459 = vunpack.c.h.b16 %v107
    %v460 = vunpack.c.l.b16 %v108
    %v461 = vunpack.c.h.b16 %v108
    %v462 = vunpack.c.l.b16 %v109
    %v463 = vunpack.c.h.b16 %v109
    %v464 = vunpack.c.l.b16 %v110
    %v465 = vunpack.c.h.b16 %v110
    %v466 = vunpack.c.l.b16 %v111
    %v467 = vunpack.c.h.b16 %v111
    %v468 = vunpack.c.l.b16 %v112
    %v469 = vunpack.c.h.b16 %v112
    %v470 = vunpack.c.l.b16 %v113
    %v471 = vunpack.c.h.b16 %v113
    %v472 = vunpack.c.l.b16 %v114
    %v473 = vunpack.c.h.b16 %v114
    %v474 = vunpack.c.l.b16 %v115
    %v475 = vunpack.c.h.b16 %v115
    %v476 = vunpack.c.l.b16 %v116
    %v477 = vunpack.c.h.b16 %v116
    %v478 = vunpack.c.l.b16 %v117
    %v479 = vunpack.c.h.b16 %v117
    %v480 = vunpack.c.l.b16 %v118
    %v481 = vunpack.c.h.b16 %v118
    %v482 = vunpack.c.l.b16 %v119
    %v483 = vunpack.c.h.b16 %v119
    %v484 = vunpack.c.l.b16 %v120
    %v485 = vunpack.c.h.b16 %v120
    %v486 = vunpack.c.l.b16 %v121
    %v487 = vunpack.c.h.b16 %v121
    %v488 = vunpack.c.l.b16 %v122
    %v489 = vunpack.c.h.b16 %v122
    %v490 = vunpack.c.l.b16 %v123
    %v491 = vunpack.c.h.b16 %v123
    %v492 = vunpack.c.l.b16 %v124
    %v493 = vunpack.c.h.b16 %v124
    %v494 = vunpack.c.l.b16 %v125
    %v495 = vunpack.c.h.b16 %v125
    %v496 = vpack.c.b16 %v436, %v432
    %v497 = vpack.c.b16 %v437, %v433
    %v498 = vpack.c.b16 %v438, %v434
    %v499 = vpack.c.b16 %v439, %v435
    %v500 = vpack.c.b16 %v444, %v440
    %v501 = vpack.c.b16 %v445, %v441
    %v502 = vpack.c.b16 %v446, %v442
    %v503 = vpack.c.b16 %v447, %v443
    %v504 = vpack.c.b16 %v452, %v448
    %v505 = vpack.c.b16 %v453, %v449
    %v506 = vpack.c.b16 %v454, %v450
    %v507 = vpack.c.b16 %v455, %v451
    %v508 = vpack.c.b16 %v460, %v456
    %v509 = vpack.c.b16 %v461, %v457
    %v510 = vpack.c.b16 %v462, %v458
    %v511 = vpack.c.b16 %v463, %v459
    %v512 = vpack.c.b16 %v468, %v464
    %v513 = vpack.c.b16 %v469, %v465
    %v514 = vpack.c.b16 %v470, %v466
    %v515 = vpack.c.b16 %v471, %v467
    %v516 = vpack.c.b16 %v476, %v472
    %v517 = vpack.c.b16 %v477, %v473
    %v518 = vpack.c.b16 %v478, %v474
    %v519 = vpack.c.b16 %v479, %v475
    %v520 = vpack.c.b16 %v484, %v480
    %v521 = vpack.c.b16 %v485, %v481
    %v522 = vpack.c.b16 %v486, %v482
    %v523 = vpack.c.b16 %v487, %v483
    %v524 = vpack.c.b16 %v492, %v488
    %v525 = vpack.c.b16 %v493, %v489
    %v526 = vpack.c.b16 %v494, %v490
    %v527 = vpack.c.b16 %v495, %v491
    %560 = vmatprep.subr.bf16.mxu0 %v525
    %561 = vmatpush1.bf16.msra.mxu0 %v524
    %562 = vmatprep.subr.bf16.mxu0 %v521
    %563 = vmatpush1.bf16.msra.mxu0 %v520
    %564 = vmatprep.subr.bf16.mxu0 %v517
    %565 = vmatpush1.bf16.msra.mxu0 %v516
    %566 = vmatprep.subr.bf16.mxu0 %v513
    %567 = vmatpush1.bf16.msra.mxu0 %v512
    %568 = vmatprep.subr.bf16.mxu0 %v509
    %569 = vmatpush1.bf16.msra.mxu0 %v508
    %570 = vmatprep.subr.bf16.mxu0 %v505
    %571 = vmatpush1.bf16.msra.mxu0 %v504
    %572 = vmatprep.subr.bf16.mxu0 %v501
    %573 = vmatpush1.bf16.msra.mxu0 %v500
    %574 = vmatprep.subr.bf16.mxu0 %v497
    %575 = vmatpush1.bf16.msra.mxu0 %v496
    %576 = vmatprep.subr.bf16.mxu0 0
    %577 = vmatpush2.bf16.msra.mxu0 0
    %578 = vmatprep.subr.bf16.mxu0 0
    %579 = vmatpush2.bf16.msra.mxu0 0
    %580 = vmatprep.subr.bf16.mxu0 0
    %581 = vmatpush2.bf16.msra.mxu0 0
    %582 = vmatprep.subr.bf16.mxu0 0
    %583 = vmatpush2.bf16.msra.mxu0 0
    %584 = vmatprep.subr.bf16.mxu0 0
    %585 = vmatpush2.bf16.msra.mxu0 0
    %586 = vmatprep.subr.bf16.mxu0 0
    %587 = vmatpush2.bf16.msra.mxu0 0
    %588 = vmatprep.subr.bf16.mxu0 0
    %589 = vmatpush2.bf16.msra.mxu0 0
    %590 = vmatprep.subr.bf16.mxu0 0
    %591 = vmatpush2.bf16.msra.mxu0 0
    %592 = vmatprep.mubr.bf16.mxu0 0
    %593 = vmatmul.mubr.bf16.gmra.mxu0 %v91
    %v594 = vpop.f32.mrf.mxu0
    %v595 = vadd.f32 %v353, %v594
    %v596 = vpop.f32.mrf.mxu0
    %v597 = vadd.f32 %v355, %v596
    %v598 = vpop.f32.mrf.mxu0
    %v599 = vpop.f32.mrf.mxu0
    %600 = vdwg.mxu0
    %601 = vmatprep.subr.bf16.mxu0 %v527
    %602 = vmatpush1.bf16.msra.mxu0 %v526
    %603 = vmatprep.subr.bf16.mxu0 %v523
    %604 = vmatpush1.bf16.msra.mxu0 %v522
    %605 = vmatprep.subr.bf16.mxu0 %v519
    %606 = vmatpush1.bf16.msra.mxu0 %v518
    %607 = vmatprep.subr.bf16.mxu0 %v515
    %608 = vmatpush1.bf16.msra.mxu0 %v514
    %609 = vmatprep.subr.bf16.mxu0 %v511
    %610 = vmatpush1.bf16.msra.mxu0 %v510
    %611 = vmatprep.subr.bf16.mxu0 %v507
    %612 = vmatpush1.bf16.msra.mxu0 %v506
    %613 = vmatprep.subr.bf16.mxu0 %v503
    %614 = vmatpush1.bf16.msra.mxu0 %v502
    %615 = vmatprep.subr.bf16.mxu0 %v499
    %616 = vmatpush1.bf16.msra.mxu0 %v498
    %617 = vmatprep.subr.bf16.mxu0 0
    %618 = vmatpush2.bf16.msra.mxu0 0
    %619 = vmatprep.subr.bf16.mxu0 0
    %620 = vmatpush2.bf16.msra.mxu0 0
    %621 = vmatprep.subr.bf16.mxu0 0
    %622 = vmatpush2.bf16.msra.mxu0 0
    %623 = vmatprep.subr.bf16.mxu0 0
    %624 = vmatpush2.bf16.msra.mxu0 0
    %625 = vmatprep.subr.bf16.mxu0 0
    %626 = vmatpush2.bf16.msra.mxu0 0
    %627 = vmatprep.subr.bf16.mxu0 0
    %628 = vmatpush2.bf16.msra.mxu0 0
    %629 = vmatprep.subr.bf16.mxu0 0
    %630 = vmatpush2.bf16.msra.mxu0 0
    %631 = vmatprep.subr.bf16.mxu0 0
    %632 = vmatpush2.bf16.msra.mxu0 0
    %633 = vmatprep.mubr.bf16.mxu0 0
    %634 = vmatmul.mubr.bf16.gmra.mxu0 %v91
    %v635 = vpop.f32.mrf.mxu0
    %v636 = vadd.f32 %v394, %v635
    %v637 = vpop.f32.mrf.mxu0
    %v638 = vadd.f32 %v396, %v637
    %v639 = vpop.f32.mrf.mxu0
    %v640 = vpop.f32.mrf.mxu0
    %641 = vdwg.mxu0
    %v642 = vld [vmem:[%s5] sm:$0xf]
    %v644 = vlaneseq
    %v645 = vshrl.u32 %v644, 7
    %v646 = vsub.s32 0, %v645
    %v647 = vrot.slane %v642, %v646
    %v648 = vlaneseq
    %v649 = vshrl.u32 %v648, 7
    %v650 = vsub.s32 1, %v649
    %v651 = vrot.slane %v642, %v650
    %v652 = vlaneseq
    %v653 = vshrl.u32 %v652, 7
    %v654 = vsub.s32 2, %v653
    %v655 = vrot.slane %v642, %v654
    %v656 = vlaneseq
    %v657 = vshrl.u32 %v656, 7
    %v658 = vsub.s32 3, %v657
    %v659 = vrot.slane %v642, %v658
    %v664 = vadd.f32 %v595, %v647
    %v665 = vadd.f32 %v597, %v651
    %v666 = vadd.f32 %v636, %v655
    %v667 = vadd.f32 %v638, %v659
    %v668 = vld [vmem:[#allocation7] sm:$0xff]
    %v669 = vxor.u32 %v664, 2147483648
    %v670 = vmul.f32 %v669, 1.442695
    %v671 = vpow.pop %v670
    %v672 = vadd.f32 %v671, 1.0
    %v673 = vrcp.pop %v672
    %v674 = vmul.f32 1.0, %v673
    %v675 = vmul.f32 %v674, %v668
    %v676 = vxor.u32 %v665, 2147483648
    %v677 = vmul.f32 %v676, 1.442695
    %v678 = vpow.pop %v677
    %v679 = vadd.f32 %v678, 1.0
    %v680 = vrcp.pop %v679
    %v681 = vmul.f32 1.0, %v680
    %v682 = vtanh.pop %v667
    %v683 = vmul.f32 %v681, %v682
    %v684 = vadd.f32 %v675, %v683
    %v685 = vxor.u32 %v666, 2147483648
    %v686 = vmul.f32 %v685, 1.442695
    %v687 = vpow.pop %v686
    %v688 = vadd.f32 %v687, 1.0
    %v689 = vrcp.pop %v688
    %v690 = vmul.f32 1.0, %v689
    %v691 = vtanh.pop %v684
    %v692 = vmul.f32 %v690, %v691
    %693 = vst [vmem:[#allocation12] sm:$0xff] %v684
    %v694 = vpack.c.bf16 %v692, %v692
    %695 = vst [vmem:[#allocation11] sm:$0xf] %v694
    // Predicated region
    $region46: #{lstm_cell.1} parent=1 // pred_check
      _
    $region47: #{lstm_cell.1} parent=1 // pred_check_branch
      %697 = sbr.rel (0) target = $region49
    $region48: #{lstm_cell.1} parent=1 // pred_region
      %s699 = ssub.s32 64, 64
      %700 = vsyncadd [#allocation4], %s699
      %s702 = sshll.u32 [#allocation11], 4
      %s703 = int_to_ptr.vmem [resolvable:$true] %s702
      %705 = dma.vmem_to_hbm [thread:$0]  %s703, 64, %s6, [#allocation4]
    $region49: #{lstm_cell.1} parent=1 // pred_fallthru
      _
    // Predicated region
    $region50: #{lstm_cell.1} parent=1 // pred_check
      _
    $region51: #{lstm_cell.1} parent=1 // pred_check_branch
      %707 = sbr.rel (0) target = $region53
    $region52: #{lstm_cell.1} parent=1 // pred_region
      %s709 = ssub.s32 128, 128
      %710 = vsyncadd [#allocation13], %s709
      %s712 = sshll.u32 [#allocation12], 4
      %s713 = int_to_ptr.vmem [resolvable:$true] %s712
      %715 = dma.vmem_to_hbm [thread:$0]  %s713, 128, %s7, [#allocation13]
    $region53: #{lstm_cell.1} parent=1 // pred_fallthru
      _
    // Predicated region
    $region54: #{lstm_cell.1} parent=1 // pred_check
      _
    $region55: #{lstm_cell.1} parent=1 // pred_check_branch
      %717 = sbr.rel (0) target = $region57
    $region56: #{lstm_cell.1} parent=1 // pred_region
      %718 = dma.done [#allocation4], 64
    $region57: #{lstm_cell.1} parent=1 // pred_fallthru
      _
    // Predicated region
    $region58: #{lstm_cell.1} parent=1 // pred_check
      _
    $region59: #{lstm_cell.1} parent=1 // pred_check_branch
      %720 = sbr.rel (0) target = $region61
    $region60: #{lstm_cell.1} parent=1 // pred_region
      %721 = dma.done [#allocation13], 128
    $region61: #{lstm_cell.1} parent=1 // pred_fallthru
      _
    %722 = vsyncpa [#allocation3], 1
    %723 = vsyncpa [#allocation6], 1
    %724 = vsyncpa [#allocation9], 1
    %725 = vsyncpa [#allocation4], 1
    %726 = vsyncpa [#allocation13], 1

</llo_original>
